<compile_context>
chip_gen: v7x
topology: tpu7x:2x2x1
jax: 0.10.0
libtpu: 0.0.40
codegen_flags: <defaults>
</compile_context>

<pallas_src>
import functools

import jax
import jax.numpy as jnp
from jax.experimental import pallas as pl
from jax.experimental.pallas import tpu as pltpu


_TARGET_F32_ELEMS = 256 * 1024          # ~1 MiB of f32 per block (roofline sweet spot)


def _layernorm2d_kernel(x_ref, w_ref, b_ref, o_ref, *, channels, inv_c, eps):
    """Per-pixel channel LayerNorm on one block.

    Block layout of x_ref / o_ref:
      (1, C, s_tile, 128)  -- fast path: C on a leading (non-tiled) axis, so the
                              channel reduction is dense elementwise VPU adds.
      (1, C, tile)         -- fallback when H*W is not a multiple of 128.
    w_ref / b_ref are full (C,) f32 arrays living in SMEM.
    """
    x = x_ref[...].astype(jnp.float32)                    # cast under the DMA (free)
    mu = jnp.sum(x, axis=1, keepdims=True) * inv_c        # mean over channels
    xc = x - mu
    var = jnp.sum(xc * xc, axis=1, keepdims=True) * inv_c # two-pass variance
    y = xc * jax.lax.rsqrt(var + eps)
    # Per-channel scalar affine from SMEM: scalar splat is a cheap VPU op, and
    # each store writes a dense slab of the output block.
    for ch in range(channels):                            # static unroll (C is traced-in)
        o_ref[0, ch] = (y[0, ch] * w_ref[ch] + b_ref[ch]).astype(o_ref.dtype)


def _pick_row_tile(s_rows, channels, n_batch):
    """Tile along the (H*W)//128 'row of 128 lanes' axis (fast path).

    Must be a multiple of 8 or equal to the full extent.  Sized so one block
    holds ~_TARGET_F32_ELEMS f32 values; bounded, never unbounded-full-extent
    for large arrays since s_rows * 128 * C is the whole image only when that
    already fits the target.
    """
    t = _TARGET_F32_ELEMS // (channels * 128)
    t = max(8, (t // 8) * 8)
    if t >= s_rows:
        t = s_rows
        # N == 1 with a single spatial tile would leave one v7x TensorCore idle;
        # split the spatial axis if a legal (multiple-of-8) half-tile exists.
        if n_batch == 1 and s_rows >= 16:
            half = -(-s_rows // 2)
            cand = ((half + 7) // 8) * 8
            if cand < s_rows:
                t = cand
    return t


def _pick_lane_tile(hw, channels):
    """Lane tile for the fallback path (H*W not a multiple of 128).

    Always a multiple of 128 (ragged last block is masked by Pallas) unless the
    whole extent is < 128 lanes; sized from actual f32 bytes so blocks stay in
    the ~1 MiB range and never exceed scoped/physical VMEM.
    """
    if hw < 128:
        return hw                               # tiny full extent is always legal
    t = _TARGET_F32_ELEMS // channels
    t = max(128, (t // 128) * 128)
    return min(t, (hw // 128) * 128)


def layernorm2d(x, weight, bias, eps=1e-6):
    """Forward pass of LayerNorm2d on an NCHW tensor (matches the PyTorch module)."""
    N, C, H, W = x.shape
    HW = H * W

    # (C,) parameters are tiny; keep them in f32 SMEM scalars.
    w = weight.astype(jnp.float32).reshape(C)
    b = bias.astype(jnp.float32).reshape(C)

    kern = functools.partial(_layernorm2d_kernel,
                             channels=C, inv_c=float(1.0 / C), eps=float(eps))

    if HW % 128 == 0:
        # Fast path: zero-copy view (N, C, S, 128) so C is a leading block axis.
        S = HW // 128
        xr = x.reshape(N, C, S, 128)
        st = _pick_row_tile(S, C, N)
        grid = (N, pl.cdiv(S, st))
        block = (1, C, st, 128)
        idx = lambda n, t: (n, 0, t, 0)
    else:
        # Fallback: (N, C, HW) with a bounded multiple-of-128 lane tile
        # (ragged tail handled by masked stores).
        xr = x.reshape(N, C, HW)
        lt = _pick_lane_tile(HW, C)
        grid = (N, pl.cdiv(HW, lt))
        block = (1, C, lt)
        idx = lambda n, t: (n, 0, t)

    out = pl.pallas_call(
        kern,
        out_shape=jax.ShapeDtypeStruct(xr.shape, x.dtype),   # native dtype out
        grid=grid,
        in_specs=[
            pl.BlockSpec(block, idx),
            pl.BlockSpec(memory_space=pltpu.MemorySpace.SMEM),   # weight (C,)
            pl.BlockSpec(memory_space=pltpu.MemorySpace.SMEM),   # bias   (C,)
        ],
        out_specs=pl.BlockSpec(block, idx),
        compiler_params=pltpu.CompilerParams(
            dimension_semantics=("parallel", "parallel")),
    )(xr, w, b)

    return out.reshape(N, C, H, W)


# TODO(synk): LayerNormFunction.backward (the custom autograd rule) is not
# implemented here; only the module's forward pass is required.


def _reference_layernorm2d(x, weight, bias, eps=1e-6):
    """Pure-JAX reference, literal transcription of LayerNormFunction.forward."""
    x = x.astype(jnp.float32)
    mu = x.mean(axis=1, keepdims=True)
    var = ((x - mu) ** 2).mean(axis=1, keepdims=True)
    y = (x - mu) / jnp.sqrt(var + eps)
    return weight.reshape(1, -1, 1, 1) * y + bias.reshape(1, -1, 1, 1)


if __name__ == "__main__":
    key = jax.random.PRNGKey(0)

    def check(shape, dtype=jnp.float32, atol=1e-4, rtol=1e-4):
        n, c, h, w = shape
        kx, kw, kb = jax.random.split(jax.random.fold_in(key, n * c * h * w), 3)
        x = (jax.random.normal(kx, shape, jnp.float32) * 3.0 + 1.5).astype(dtype)
        weight = jax.random.normal(kw, (c,), jnp.float32)
        bias = jax.random.normal(kb, (c,), jnp.float32)

        fwd = jax.jit(layernorm2d)
        y = fwd(x, weight, bias)
        jax.block_until_ready(y)

        assert y.shape == x.shape, f"shape mismatch at {shape}"
        assert y.dtype == x.dtype, f"dtype mismatch at {shape}: {y.dtype} vs {x.dtype}"

        y_ref = _reference_layernorm2d(x.astype(jnp.float32), weight, bias)
        y_f32 = y.astype(jnp.float32)
        err = jnp.max(jnp.abs(y_f32 - y_ref))
        assert jnp.allclose(y_f32, y_ref, atol=atol, rtol=rtol), (
            f"mismatch at {shape} / {dtype}: max abs err {err}")

    # Primary shape implied by the module: NCHW, batch=2, channels=4, 16x16.
    check((2, 4, 16, 16))
    # Multi-tile fast path + N==1 spatial split (keeps both v7x TCs busy).
    check((1, 64, 64, 64))
    # Spatial extent not a multiple of 128 -> bounded-tile fallback path.
    check((2, 32, 12, 12))
    # Native bf16 in/out (no wrapper-side f32 copies; cast happens in-kernel).
    check((2, 4, 16, 16), dtype=jnp.bfloat16, atol=5e-2, rtol=5e-2)

    print("KERNEL_OK")
</pallas_src>

<mosaic_0001>
module attributes {stable_mosaic.version = 11 : i64} {
  func.func @_layernorm2d_kernel(%arg0: i32, %arg1: i32, %arg2: memref<1x4x2x128xf32, #tpu.memory_space<vmem>>, %arg3: memref<4xf32, #tpu.memory_space<smem>>, %arg4: memref<4xf32, #tpu.memory_space<smem>>, %arg5: memref<1x4x2x128xf32, #tpu.memory_space<vmem>>) attributes {dimension_semantics = [#tpu.dimension_semantics<parallel>, #tpu.dimension_semantics<parallel>], iteration_bounds = array<i64: 2, 1>, scalar_prefetch = 0 : i64, scratch_operands = 0 : i64, tpu.core_type = #tpu.core_type<tc>, window_params = [{transform_indices = @transform_0, window_bounds = array<i64: 1, 4, 2, 128>}, {transform_indices = @transform_1, window_bounds = array<i64: 4>}, {transform_indices = @transform_2, window_bounds = array<i64: 4>}, {transform_indices = @transform_3, window_bounds = array<i64: 1, 4, 2, 128>}]} {
    %c0 = arith.constant 0 : index
    %c0_0 = arith.constant 0 : index
    %c0_1 = arith.constant 0 : index
    %c0_2 = arith.constant 0 : index
    %0 = vector.load %arg2[%c0, %c0_0, %c0_1, %c0_2] : memref<1x4x2x128xf32, #tpu.memory_space<vmem>>, vector<1x4x2x128xf32>
    %cst = arith.constant dense<0.000000e+00> : vector<1x2x128xf32>
    %1 = vector.multi_reduction <add>, %0, %cst [1] : vector<1x4x2x128xf32> to vector<1x2x128xf32>
    %2 = vector.shape_cast %1 : vector<1x2x128xf32> to vector<1x1x2x128xf32>
    %cst_3 = arith.constant 2.500000e-01 : f32
    %3 = vector.broadcast %cst_3 : f32 to vector<1x1x2x128xf32>
    %4 = arith.mulf %2, %3 : vector<1x1x2x128xf32>
    %5 = vector.broadcast %4 : vector<1x1x2x128xf32> to vector<1x4x2x128xf32>
    %6 = arith.subf %0, %5 : vector<1x4x2x128xf32>
    %7 = arith.mulf %6, %6 : vector<1x4x2x128xf32>
    %cst_4 = arith.constant dense<0.000000e+00> : vector<1x2x128xf32>
    %8 = vector.multi_reduction <add>, %7, %cst_4 [1] : vector<1x4x2x128xf32> to vector<1x2x128xf32>
    %9 = vector.shape_cast %8 : vector<1x2x128xf32> to vector<1x1x2x128xf32>
    %cst_5 = arith.constant 2.500000e-01 : f32
    %10 = vector.broadcast %cst_5 : f32 to vector<1x1x2x128xf32>
    %11 = arith.mulf %9, %10 : vector<1x1x2x128xf32>
    %cst_6 = arith.constant 9.99999997E-7 : f32
    %12 = vector.broadcast %cst_6 : f32 to vector<1x1x2x128xf32>
    %13 = arith.addf %11, %12 : vector<1x1x2x128xf32>
    %14 = math.rsqrt %13 : vector<1x1x2x128xf32>
    %15 = vector.broadcast %14 : vector<1x1x2x128xf32> to vector<1x4x2x128xf32>
    %16 = arith.mulf %6, %15 : vector<1x4x2x128xf32>
    %17 = vector.extract_strided_slice %16 {offsets = [0, 0, 0, 0], sizes = [1, 1, 2, 128], strides = [1, 1, 1, 1]} : vector<1x4x2x128xf32> to vector<1x1x2x128xf32>
    %18 = vector.shape_cast %17 : vector<1x1x2x128xf32> to vector<2x128xf32>
    %c0_7 = arith.constant 0 : index
    %19 = memref.load %arg3[%c0_7] : memref<4xf32, #tpu.memory_space<smem>>
    %20 = vector.broadcast %19 : f32 to vector<2x128xf32>
    %21 = arith.mulf %18, %20 : vector<2x128xf32>
    %c0_8 = arith.constant 0 : index
    %22 = memref.load %arg4[%c0_8] : memref<4xf32, #tpu.memory_space<smem>>
    %23 = vector.broadcast %22 : f32 to vector<2x128xf32>
    %24 = arith.addf %21, %23 : vector<2x128xf32>
    %c0_9 = arith.constant 0 : index
    %c0_10 = arith.constant 0 : index
    %c0_11 = arith.constant 0 : index
    %c0_12 = arith.constant 0 : index
    %25 = vector.load %arg5[%c0_9, %c0_10, %c0_11, %c0_12] : memref<1x4x2x128xf32, #tpu.memory_space<vmem>>, vector<1x1x2x128xf32>
    %26 = vector.shape_cast %25 : vector<1x1x2x128xf32> to vector<2x128xf32>
    %27 = vector.shape_cast %24 : vector<2x128xf32> to vector<1x1x2x128xf32>
    tpu.vector_store %arg5[%c0_9, %c0_10, %c0_11, %c0_12], %27 {strides = array<i32>} : memref<1x4x2x128xf32, #tpu.memory_space<vmem>>, vector<1x1x2x128xf32>,
    %28 = vector.extract_strided_slice %16 {offsets = [0, 1, 0, 0], sizes = [1, 1, 2, 128], strides = [1, 1, 1, 1]} : vector<1x4x2x128xf32> to vector<1x1x2x128xf32>
    %29 = vector.shape_cast %28 : vector<1x1x2x128xf32> to vector<2x128xf32>
    %c1 = arith.constant 1 : index
    %30 = memref.load %arg3[%c1] : memref<4xf32, #tpu.memory_space<smem>>
    %31 = vector.broadcast %30 : f32 to vector<2x128xf32>
    %32 = arith.mulf %29, %31 : vector<2x128xf32>
    %c1_13 = arith.constant 1 : index
    %33 = memref.load %arg4[%c1_13] : memref<4xf32, #tpu.memory_space<smem>>
    %34 = vector.broadcast %33 : f32 to vector<2x128xf32>
    %35 = arith.addf %32, %34 : vector<2x128xf32>
    %c0_14 = arith.constant 0 : index
    %c1_15 = arith.constant 1 : index
    %c0_16 = arith.constant 0 : index
    %c0_17 = arith.constant 0 : index
    %36 = vector.load %arg5[%c0_14, %c1_15, %c0_16, %c0_17] : memref<1x4x2x128xf32, #tpu.memory_space<vmem>>, vector<1x1x2x128xf32>
    %37 = vector.shape_cast %36 : vector<1x1x2x128xf32> to vector<2x128xf32>
    %38 = vector.shape_cast %35 : vector<2x128xf32> to vector<1x1x2x128xf32>
    tpu.vector_store %arg5[%c0_14, %c1_15, %c0_16, %c0_17], %38 {strides = array<i32>} : memref<1x4x2x128xf32, #tpu.memory_space<vmem>>, vector<1x1x2x128xf32>,
    %39 = vector.extract_strided_slice %16 {offsets = [0, 2, 0, 0], sizes = [1, 1, 2, 128], strides = [1, 1, 1, 1]} : vector<1x4x2x128xf32> to vector<1x1x2x128xf32>
    %40 = vector.shape_cast %39 : vector<1x1x2x128xf32> to vector<2x128xf32>
    %c2 = arith.constant 2 : index
    %41 = memref.load %arg3[%c2] : memref<4xf32, #tpu.memory_space<smem>>
    %42 = vector.broadcast %41 : f32 to vector<2x128xf32>
    %43 = arith.mulf %40, %42 : vector<2x128xf32>
    %c2_18 = arith.constant 2 : index
    %44 = memref.load %arg4[%c2_18] : memref<4xf32, #tpu.memory_space<smem>>
    %45 = vector.broadcast %44 : f32 to vector<2x128xf32>
    %46 = arith.addf %43, %45 : vector<2x128xf32>
    %c0_19 = arith.constant 0 : index
    %c2_20 = arith.constant 2 : index
    %c0_21 = arith.constant 0 : index
    %c0_22 = arith.constant 0 : index
    %47 = vector.load %arg5[%c0_19, %c2_20, %c0_21, %c0_22] : memref<1x4x2x128xf32, #tpu.memory_space<vmem>>, vector<1x1x2x128xf32>
    %48 = vector.shape_cast %47 : vector<1x1x2x128xf32> to vector<2x128xf32>
    %49 = vector.shape_cast %46 : vector<2x128xf32> to vector<1x1x2x128xf32>
    tpu.vector_store %arg5[%c0_19, %c2_20, %c0_21, %c0_22], %49 {strides = array<i32>} : memref<1x4x2x128xf32, #tpu.memory_space<vmem>>, vector<1x1x2x128xf32>,
    %50 = vector.extract_strided_slice %16 {offsets = [0, 3, 0, 0], sizes = [1, 1, 2, 128], strides = [1, 1, 1, 1]} : vector<1x4x2x128xf32> to vector<1x1x2x128xf32>
    %51 = vector.shape_cast %50 : vector<1x1x2x128xf32> to vector<2x128xf32>
    %c3 = arith.constant 3 : index
    %52 = memref.load %arg3[%c3] : memref<4xf32, #tpu.memory_space<smem>>
    %53 = vector.broadcast %52 : f32 to vector<2x128xf32>
    %54 = arith.mulf %51, %53 : vector<2x128xf32>
    %c3_23 = arith.constant 3 : index
    %55 = memref.load %arg4[%c3_23] : memref<4xf32, #tpu.memory_space<smem>>
    %56 = vector.broadcast %55 : f32 to vector<2x128xf32>
    %57 = arith.addf %54, %56 : vector<2x128xf32>
    %c0_24 = arith.constant 0 : index
    %c3_25 = arith.constant 3 : index
    %c0_26 = arith.constant 0 : index
    %c0_27 = arith.constant 0 : index
    %58 = vector.load %arg5[%c0_24, %c3_25, %c0_26, %c0_27] : memref<1x4x2x128xf32, #tpu.memory_space<vmem>>, vector<1x1x2x128xf32>
    %59 = vector.shape_cast %58 : vector<1x1x2x128xf32> to vector<2x128xf32>
    %60 = vector.shape_cast %57 : vector<2x128xf32> to vector<1x1x2x128xf32>
    tpu.vector_store %arg5[%c0_24, %c3_25, %c0_26, %c0_27], %60 {strides = array<i32>} : memref<1x4x2x128xf32, #tpu.memory_space<vmem>>, vector<1x1x2x128xf32>,
    return
  }
  func.func @transform_0(%arg0: i32, %arg1: i32) -> (i32, i32, i32, i32) {
    %c0_i32 = arith.constant 0 : i32
    %c0_i32_0 = arith.constant 0 : i32
    %c0_i32_1 = arith.constant 0 : i32
    return %arg0, %c0_i32, %arg1, %c0_i32_0 : i32, i32, i32, i32
  }
  func.func @transform_1(%arg0: i32, %arg1: i32) -> i32 {
    %c0_i32 = arith.constant 0 : i32
    %c0_i32_0 = arith.constant 0 : i32
    return %c0_i32 : i32
  }
  func.func @transform_2(%arg0: i32, %arg1: i32) -> i32 {
    %c0_i32 = arith.constant 0 : i32
    %c0_i32_0 = arith.constant 0 : i32
    return %c0_i32 : i32
  }
  func.func @transform_3(%arg0: i32, %arg1: i32) -> (i32, i32, i32, i32) {
    %c0_i32 = arith.constant 0 : i32
    %c0_i32_0 = arith.constant 0 : i32
    %c0_i32_1 = arith.constant 0 : i32
    return %arg0, %c0_i32, %arg1, %c0_i32_0 : i32, i32, i32, i32
  }
}

</mosaic_0001>

<llo_original>
// kernel: layernorm2d.1
$region0: #{layernorm2d.1}
  #allocation0 [shape = 'u32[]', space=smem, size = 0x4, offset = 0x4, fixed_abs, tag = 'smem constant byte address 0x4 - core index']
  #allocation1 [shape = 'u32[144,128]{1,0:T(1,128)}', space=vmem, size = 0x12000, scoped, tag = 'internal scratch']
  %s0 = inlined_call_operand.vmem [shape: f32[2,4,2,128], index: 0, kind: input, shape index: {}]
  %s1 = inlined_call_operand.vmem [shape: f32[4], index: 1, kind: input, shape index: {}]
  %s2 = inlined_call_operand.vmem [shape: f32[4], index: 2, kind: input, shape index: {}]
  %s3 = inlined_call_operand.vmem [shape: f32[2,4,2,128], index: 3, kind: output, shape index: {}]
  %s4 = sld [smem:[#allocation0]]
  $region53: #{layernorm2d.1} parent=0
    _
  %s6 = ssub.s32 1, %s4
  %s7 = scalar_select 0, %s6, %s4
  $region1: #{layernorm2d.1} parent=0
    #allocation2 [shape = 'u8[512]{0}', space=smem, size = 0x200, scoped, tag = 'input window, operand 1, single buffered']
    #allocation3 [shape = 's32[2]{0}', space=sflag, size = 0x8, scoped, tag = 'scoped memory for layernorm2d.1']
    #allocation4 [shape = 'u8[512]{0}', space=smem, size = 0x200, scoped, tag = 'input window, operand 2, single buffered']
    #allocation5 [shape = 's32[1]{0}', space=sflag, size = 0x4, scoped, tag = 'scoped memory for layernorm2d.1']
    %8 = vsyncpa [#allocation3], 0
    %9 = vsyncpa [#allocation5], 0
    loop: start=0, step=1, limit=4
    $region2: #{layernorm2d.1} parent=1 // loop_pre_header
      _
    $region3: #{layernorm2d.1} parent=1 // loop_header
      %s11 = sphi 0, %s15
      %p12 = scmp.ge.s32.totalorder %s11, 4
      %s18 = sphi 0, %s30
      %s19 = sphi 0, %s26
      %s20 = sphi 0, %s18
      %s21 = sphi 0, %s19
      %s22 = sphi 0, %s20
      %s23 = sphi 0, %s21
      %s35 = sphi 0, %s37
      %s38 = sphi 0, %s35
      %s39 = sphi 0, %s38
      %s55 = sphi 0, %s39
      %s59 = sphi 0, %s59
      %s61 = sphi 0, %s59
      %s62 = sphi 0, %s61
      %s76 = sphi 0, %s62
      %s80 = sphi 0, %s80
      %s82 = sphi 0, %s80
      %s83 = sphi 0, %s82
      %s97 = sphi 0, %s83
      %s105 = sphi 0, %s107
      %s108 = sphi 0, %s105
      %s109 = sphi 0, %s108
      %s125 = sphi 0, %s109
    $region4: #{layernorm2d.1} parent=1 // loop_header_branch
      %14 = sbr.rel (%p12) target = $region8
    $region5: #{layernorm2d.1} parent=1 // loop_body
      %s16 = ssub.s32 %s11, 1
      %s17 = ssub.s32 %s11, 2
      %s24 = sadd.s32 1, %s19
      %p25 = scmp.ge.s32.totalorder %s24, 1
      %s26 = scalar_select %p25, 0, %s24
      %s27 = sadd.s32 1, %s18
      %s28 = scalar_select %p25, %s27, %s18
      %p29 = scmp.ge.s32.totalorder %s28, 2
      %s30 = scalar_select %p29, 0, %s28
      %s31 = ssub.s32 %s18, %s30
      %s32 = ssub.s32 %s19, %s26
      %s33 = sor.u32 %s31, %s32
      %p34 = scmp.eq.s32.totalorder %s33, 0
      %s36 = sadd.s32 %s35, 1
      %s37 = scalar_select %p34, %s35, %s36
      %p40 = pneg %p34
      %p41 = scmp.eq.s32.totalorder %s11, 1
      %p42 = por %p40, %p41
      %p43 = scmp.ne.s32.totalorder %s35, %s38
      %p44 = scmp.eq.s32.totalorder %s11, 0
      %p45 = por %p43, %p44
      %p46 = scmp.ne.s32.totalorder %s35, %s38
      %p47 = scmp.eq.s32.totalorder %s16, 1
      %p48 = por %p46, %p47
      %p49 = scmp.ne.s32.totalorder %s38, %s39
      %p50 = scmp.eq.s32.totalorder %s16, 0
      %p51 = por %p49, %p50
      %p52 = scmp.ne.s32.totalorder %s38, %s39
      %p53 = scmp.eq.s32.totalorder %s17, 1
      %p54 = por %p52, %p53
      %p56 = scmp.ne.s32.totalorder %s39, %s55
      %p57 = scmp.eq.s32.totalorder %s17, 0
      %p58 = por %p56, %p57
      %s60 = sadd.s32 %s59, 1
      %p63 = scmp.eq.s32.totalorder %s11, 1
      %p64 = scmp.ne.s32.totalorder %s59, %s61
      %p65 = scmp.eq.s32.totalorder %s11, 0
      %p66 = por %p64, %p65
      %p67 = scmp.ne.s32.totalorder %s59, %s61
      %p68 = scmp.eq.s32.totalorder %s16, 1
      %p69 = por %p67, %p68
      %p70 = scmp.ne.s32.totalorder %s61, %s62
      %p71 = scmp.eq.s32.totalorder %s16, 0
      %p72 = por %p70, %p71
      %p73 = scmp.ne.s32.totalorder %s61, %s62
      %p74 = scmp.eq.s32.totalorder %s17, 1
      %p75 = por %p73, %p74
      %p77 = scmp.ne.s32.totalorder %s62, %s76
      %p78 = scmp.eq.s32.totalorder %s17, 0
      %p79 = por %p77, %p78
      %s81 = sadd.s32 %s80, 1
      %p84 = scmp.eq.s32.totalorder %s11, 1
      %p85 = scmp.ne.s32.totalorder %s80, %s82
      %p86 = scmp.eq.s32.totalorder %s11, 0
      %p87 = por %p85, %p86
      %p88 = scmp.ne.s32.totalorder %s80, %s82
      %p89 = scmp.eq.s32.totalorder %s16, 1
      %p90 = por %p88, %p89
      %p91 = scmp.ne.s32.totalorder %s82, %s83
      %p92 = scmp.eq.s32.totalorder %s16, 0
      %p93 = por %p91, %p92
      %p94 = scmp.ne.s32.totalorder %s82, %s83
      %p95 = scmp.eq.s32.totalorder %s17, 1
      %p96 = por %p94, %p95
      %p98 = scmp.ne.s32.totalorder %s83, %s97
      %p99 = scmp.eq.s32.totalorder %s17, 0
      %p100 = por %p98, %p99
      %s101 = ssub.s32 %s18, %s30
      %s102 = ssub.s32 %s19, %s26
      %s103 = sor.u32 %s101, %s102
      %p104 = scmp.eq.s32.totalorder %s103, 0
      %s106 = sadd.s32 %s105, 1
      %s107 = scalar_select %p104, %s105, %s106
      %p110 = pneg %p104
      %p111 = scmp.eq.s32.totalorder %s11, 1
      %p112 = por %p110, %p111
      %p113 = scmp.ne.s32.totalorder %s105, %s108
      %p114 = scmp.eq.s32.totalorder %s11, 0
      %p115 = por %p113, %p114
      %p116 = scmp.ne.s32.totalorder %s105, %s108
      %p117 = scmp.eq.s32.totalorder %s16, 1
      %p118 = por %p116, %p117
      %p119 = scmp.ne.s32.totalorder %s108, %s109
      %p120 = scmp.eq.s32.totalorder %s16, 0
      %p121 = por %p119, %p120
      %p122 = scmp.ne.s32.totalorder %s108, %s109
      %p123 = scmp.eq.s32.totalorder %s17, 1
      %p124 = por %p122, %p123
      %p126 = scmp.ne.s32.totalorder %s109, %s125
      %p127 = scmp.eq.s32.totalorder %s17, 0
      %p128 = por %p126, %p127
      %p129 = scmp.le.s32.totalorder 1, %s11
      %p130 = scmp.lt.s32.totalorder %s11, 3
      %p131 = pnand %p129, %p130
      %p132 = pneg %p131
      // Predicated region
      $region9: #{layernorm2d.1} parent=5 // pred_check
        _
      $region10: #{layernorm2d.1} parent=5 // pred_check_branch
        %134 = sbr.rel (%p131) target = $region12
      $region11: #{layernorm2d.1} parent=5 // pred_region
        %s135 = ssub.s32 %s11, 1
        // Predicated region
        $region13: #{layernorm2d.1} parent=11 // pred_check
          %p136 = pneg %p72
        $region14: #{layernorm2d.1} parent=11 // pred_check_branch
          %138 = sbr.rel (%p136) target = $region16
        $region15: #{layernorm2d.1} parent=11 // pred_region
          %s140 = ssub.s32 16, 16
          %141 = vsyncadd [#allocation3], %s140
          %s143 = sshll.u32 %s1, 4
          %s144 = int_to_ptr.vmem [resolvable:$true] %s143
          %146 = dma.vmem_to_smem %s144, 16, [#allocation2], [#allocation3]
        $region16: #{layernorm2d.1} parent=11 // pred_fallthru
          _
        // Predicated region
        $region17: #{layernorm2d.1} parent=11 // pred_check
          %p147 = pneg %p93
        $region18: #{layernorm2d.1} parent=11 // pred_check_branch
          %149 = sbr.rel (%p147) target = $region20
        $region19: #{layernorm2d.1} parent=11 // pred_region
          %s151 = ssub.s32 16, 16
          %152 = vsyncadd [#allocation5], %s151
          %s154 = sshll.u32 %s2, 4
          %s155 = int_to_ptr.vmem [resolvable:$true] %s154
          %157 = dma.vmem_to_smem %s155, 16, [#allocation4], [#allocation5]
        $region20: #{layernorm2d.1} parent=11 // pred_fallthru
          _
      $region12: #{layernorm2d.1} parent=5 // pred_fallthru
        _
      %p158 = scmp.lt.s32.totalorder %s11, 2
      // Predicated region
      $region21: #{layernorm2d.1} parent=5 // pred_check
        %p159 = pneg %p158
      $region22: #{layernorm2d.1} parent=5 // pred_check_branch
        %161 = sbr.rel (%p159) target = $region24
      $region23: #{layernorm2d.1} parent=5 // pred_region
        // Predicated region
        $region25: #{layernorm2d.1} parent=23 // pred_check
          %p162 = pneg %p45
        $region26: #{layernorm2d.1} parent=23 // pred_check_branch
          %164 = sbr.rel (%p162) target = $region28
        $region27: #{layernorm2d.1} parent=23 // pred_region
          %p165 = scmp.lt.s32.totalorder %s18, 1
          %s166 = scalar_select %p165, %s18, 1
          %p167 = scmp.lt.s32.totalorder %s19, 0
          %s168 = scalar_select %p167, %s19, 0
          %s169 = smul.addr %s166, 4
          %s170 = sadd.s32 %s168, %s169
          %s171 = smul.addr %s170, 2
          %s172 = scalar_lea.vmem %s0, %s171
        $region28: #{layernorm2d.1} parent=23 // pred_fallthru
          _
      $region24: #{layernorm2d.1} parent=5 // pred_fallthru
        _
      %p173 = scmp.le.s32.totalorder 1, %s11
      %p174 = scmp.lt.s32.totalorder %s11, 3
      %p175 = pnand %p173, %p174
      %p176 = pneg %p175
      // Predicated region
      $region29: #{layernorm2d.1} parent=5 // pred_check
        _
      $region30: #{layernorm2d.1} parent=5 // pred_check_branch
        %178 = sbr.rel (%p175) target = $region32
      $region31: #{layernorm2d.1} parent=5 // pred_region
        %s179 = ssub.s32 %s11, 1
        // Predicated region
        $region33: #{layernorm2d.1} parent=31 // pred_check
          %p180 = pneg %p72
        $region34: #{layernorm2d.1} parent=31 // pred_check_branch
          %182 = sbr.rel (%p180) target = $region36
        $region35: #{layernorm2d.1} parent=31 // pred_region
          %183 = dma.done [#allocation3], 16
        $region36: #{layernorm2d.1} parent=31 // pred_fallthru
          _
        // Predicated region
        $region37: #{layernorm2d.1} parent=31 // pred_check
          %p184 = pneg %p93
        $region38: #{layernorm2d.1} parent=31 // pred_check_branch
          %186 = sbr.rel (%p184) target = $region40
        $region39: #{layernorm2d.1} parent=31 // pred_region
          %187 = dma.done [#allocation5], 16
        $region40: #{layernorm2d.1} parent=31 // pred_fallthru
          _
        %188 = sfence
        %p189 = scmp.lt.s32.totalorder %s20, 1
        %s190 = scalar_select %p189, %s20, 1
        %p191 = scmp.lt.s32.totalorder %s21, 0
        %s192 = scalar_select %p191, %s21, 0
        %s193 = smul.addr %s190, 4
        %s194 = sadd.s32 %s192, %s193
        %s195 = smul.addr %s194, 2
        %s196 = scalar_lea.vmem %s0, %s195
        %p197 = pneg %p51
        %p198 = pneg %p48
        %p199 = pneg %p72
        %p200 = pneg %p69
        %p201 = pneg %p93
        %p202 = pneg %p90
        %p203 = pneg %p121
        %p204 = pneg %p118
        %p205 = scmp.lt.s32.totalorder %s20, 1
        %s206 = scalar_select %p205, %s20, 1
        %p207 = scmp.lt.s32.totalorder %s21, 0
        %s208 = scalar_select %p207, %s21, 0
        %s209 = smul.addr %s206, 4
        %s210 = sadd.s32 %s208, %s209
        %s211 = smul.addr %s210, 2
        %s212 = scalar_lea.vmem %s3, %s211
        %p213 = scmp.lt.s32.totalorder %s20, 1
        %s214 = scalar_select %p213, %s20, 1
        %p215 = scmp.lt.s32.totalorder %s21, 0
        %s216 = scalar_select %p215, %s21, 0
        %s217 = smul.addr %s214, 4
        %s218 = sadd.s32 %s216, %s217
        %s219 = smul.addr %s218, 2
        %s220 = scalar_lea.vmem %s0, %s219
        %p221 = scmp.lt.s32.totalorder %s20, 1
        %s222 = scalar_select %p221, %s20, 1
        %p223 = scmp.lt.s32.totalorder %s21, 0
        %s224 = scalar_select %p223, %s21, 0
        %s225 = smul.addr %s222, 4
        %s226 = sadd.s32 %s224, %s225
        %s227 = smul.addr %s226, 2
        %s228 = scalar_lea.vmem %s3, %s227
        %v229 = vld [vmem:[%s220] sm:$0x3]
        %v230 = vld [vmem:[%s220 + $0x2] sm:$0x3]
        %v231 = vld [vmem:[%s220 + $0x4] sm:$0x3]
        %v232 = vld [vmem:[%s220 + $0x6] sm:$0x3]
        %vm233 = vcmask 1041408
        %v234 = vsel %vm233, %v229, 0.0
        %v235 = vsel %vm233, %v230, 0.0
        %v236 = vadd.f32 %v234, %v235
        %v237 = vsel %vm233, %v231, 0.0
        %v238 = vadd.f32 %v236, %v237
        %v239 = vsel %vm233, %v232, 0.0
        %v240 = vadd.f32 %v238, %v239
        %v241 = vmul.f32 %v240, 0.25
        %v242 = vsub.f32 %v229, %v241
        %v243 = vsub.f32 %v230, %v241
        %v244 = vsub.f32 %v231, %v241
        %v245 = vsub.f32 %v232, %v241
        %v246 = vmul.f32 %v242, %v242
        %v247 = vmul.f32 %v243, %v243
        %v248 = vmul.f32 %v244, %v244
        %v249 = vmul.f32 %v245, %v245
        %v250 = vsel %vm233, %v246, 0.0
        %v251 = vsel %vm233, %v247, 0.0
        %v252 = vadd.f32 %v250, %v251
        %v253 = vsel %vm233, %v248, 0.0
        %v254 = vadd.f32 %v252, %v253
        %v255 = vsel %vm233, %v249, 0.0
        %v256 = vadd.f32 %v254, %v255
        %v257 = vmul.f32 %v256, 0.25
        %v258 = vadd.f32 %v257, 1e-06
        %v259 = vrsqrt.pop %v258
        %v260 = vmul.f32 %v242, %v259
        %v261 = vmul.f32 %v243, %v259
        %v262 = vmul.f32 %v244, %v259
        %v263 = vmul.f32 %v245, %v259
        %s264 = sld [smem:[#allocation2]]
        %v265 = vstv %s264
        %v266 = vmul.f32 %v260, %v265
        %s267 = sld [smem:[#allocation4]]
        %v268 = vstv %s267
        %v269 = vadd.f32 %v266, %v268
        %270 = vst [vmem:[%s228] sm:$0x3] %v269
        %s271 = sld [smem:[#allocation2 + $0x1]]
        %v272 = vstv %s271
        %v273 = vmul.f32 %v261, %v272
        %s274 = sld [smem:[#allocation4 + $0x1]]
        %v275 = vstv %s274
        %v276 = vadd.f32 %v273, %v275
        %s277 = scalar_lea.vmem %s228, 2
        %278 = vst [vmem:[%s277] sm:$0x3] %v276
        %s279 = sld [smem:[#allocation2 + $0x2]]
        %v280 = vstv %s279
        %v281 = vmul.f32 %v262, %v280
        %s282 = sld [smem:[#allocation4 + $0x2]]
        %v283 = vstv %s282
        %v284 = vadd.f32 %v281, %v283
        %s285 = scalar_lea.vmem %s228, 4
        %286 = vst [vmem:[%s285] sm:$0x3] %v284
        %s287 = sld [smem:[#allocation2 + $0x3]]
        %v288 = vstv %s287
        %v289 = vmul.f32 %v263, %v288
        %s290 = sld [smem:[#allocation4 + $0x3]]
        %v291 = vstv %s290
        %v292 = vadd.f32 %v289, %v291
        %s293 = scalar_lea.vmem %s228, 6
        %294 = vst [vmem:[%s293] sm:$0x3] %v292
        %p295 = scmp.lt.s32.totalorder %s20, 1
        %s296 = scalar_select %p295, %s20, 1
        %p297 = scmp.lt.s32.totalorder %s21, 0
        %s298 = scalar_select %p297, %s21, 0
        %s299 = smul.addr %s296, 4
        %s300 = sadd.s32 %s298, %s299
        %s301 = smul.addr %s300, 2
        %s302 = scalar_lea.vmem %s3, %s301
        // Predicated region
        $region41: #{layernorm2d.1} parent=31 // pred_check
          %p303 = pneg %p118
        $region42: #{layernorm2d.1} parent=31 // pred_check_branch
          %305 = sbr.rel (%p303) target = $region44
        $region43: #{layernorm2d.1} parent=31 // pred_region
          _
        $region44: #{layernorm2d.1} parent=31 // pred_fallthru
          _
      $region32: #{layernorm2d.1} parent=5 // pred_fallthru
        _
      %p306 = scmp.le.s32.totalorder 2, %s11
      // Predicated region
      $region45: #{layernorm2d.1} parent=5 // pred_check
        %p307 = pneg %p306
      $region46: #{layernorm2d.1} parent=5 // pred_check_branch
        %309 = sbr.rel (%p307) target = $region48
      $region47: #{layernorm2d.1} parent=5 // pred_region
        %s310 = ssub.s32 %s11, 2
        // Predicated region
        $region49: #{layernorm2d.1} parent=47 // pred_check
          %p311 = pneg %p124
        $region50: #{layernorm2d.1} parent=47 // pred_check_branch
          %313 = sbr.rel (%p311) target = $region52
        $region51: #{layernorm2d.1} parent=47 // pred_region
          %p314 = scmp.lt.s32.totalorder %s22, 1
          %s315 = scalar_select %p314, %s22, 1
          %p316 = scmp.lt.s32.totalorder %s23, 0
          %s317 = scalar_select %p316, %s23, 0
          %s318 = smul.addr %s315, 4
          %s319 = sadd.s32 %s317, %s318
          %s320 = smul.addr %s319, 2
          %s321 = scalar_lea.vmem %s3, %s320
        $region52: #{layernorm2d.1} parent=47 // pred_fallthru
          _
      $region48: #{layernorm2d.1} parent=5 // pred_fallthru
        _
    $region6: #{layernorm2d.1} parent=1 // loop_footer
      %s15 = sadd.s32 1, %s11
    $region7: #{layernorm2d.1} parent=1 // loop_footer_branch
      %10 = sbr.rel target = $region3
    $region8: #{layernorm2d.1} parent=1 // loop_exit
      _
    %322 = vsyncpa [#allocation3], 1
    %s323 = scalar_lea.sflag [#allocation3], 1
    %324 = vsyncpa %s323, 1
    %325 = vsyncpa [#allocation5], 1

</llo_original>
